<compile_context>
chip_gen: v7x
topology: tpu7x:2x2x1
jax: 0.10.0
libtpu: 0.0.40
codegen_flags: <defaults>
</compile_context>

<pallas_src>
import jax
import jax.numpy as jnp
from jax.experimental import pallas as pl
from jax.experimental.pallas import tpu as pltpu

BN_EPS = 1e-5
LANE = 128
FUSE_VMEM_BUDGET = 20 << 20   # fuse the whole MLP when the estimate fits comfortably


def _round_up(x, m):
    return (x + m - 1) // m * m


def _pad_to(a, shape, dtype=jnp.float32):
    """Zero-pad a (<=2-D) array up to `shape` and cast."""
    out = jnp.zeros(shape, dtype)
    return out.at[tuple(slice(0, s) for s in a.shape)].set(a.astype(dtype))


# ---------------------------------------------------------------------------
# Fully fused kernel (whole MLP in one pallas_call, activations never hit HBM)
# ---------------------------------------------------------------------------

def _make_fused_kernel(num_hidden, batch, b_pad, use_bf16):
    has_pad_rows = b_pad > batch

    def kernel(*refs):
        x_ref = refs[0]
        out_ref = refs[-1]
        prefs = refs[1:-1]

        a = x_ref[...].astype(jnp.float32)
        if has_pad_rows:
            row = jax.lax.broadcasted_iota(jnp.int32, (b_pad, 1), 0)
            valid = row < batch
        inv_n = jnp.float32(1.0 / batch)

        idx = 0
        for _ in range(num_hidden):
            w_ref, b_ref, gb_ref = prefs[idx:idx + 3]
            idx += 3
            lhs = a.astype(jnp.bfloat16) if use_bf16 else a
            h = jnp.dot(lhs, w_ref[...], preferred_element_type=jnp.float32)
            h = jnp.maximum(h + b_ref[...], 0.0)                      # Linear + ReLU
            # Exact two-pass BatchNorm statistics over the valid batch rows.
            hm = jnp.where(valid, h, 0.0) if has_pad_rows else h
            mean = jnp.sum(hm, axis=0, keepdims=True) * inv_n
            d = h - mean
            dm = jnp.where(valid, d, 0.0) if has_pad_rows else d
            var = jnp.sum(dm * dm, axis=0, keepdims=True) * inv_n
            scale = gb_ref[0:1, :] * jax.lax.rsqrt(var + BN_EPS)      # gamma * rsqrt
            shift = gb_ref[1:2, :] - mean * scale                     # beta - mean*scale
            a = h * scale + shift

        w_ref, b_ref = prefs[idx:idx + 2]
        lhs = a.astype(jnp.bfloat16) if use_bf16 else a
        out = jnp.dot(lhs, w_ref[...], preferred_element_type=jnp.float32) + b_ref[...]
        out_ref[...] = out.astype(out_ref.dtype)

    return kernel


def _fused_vmem_estimate(b_pad, pads, w_bytes):
    act = 3 * b_pad * max(pads) * 4                                   # live activation temps
    weights = sum(pads[i] * pads[i + 1] for i in range(len(pads) - 1)) * w_bytes
    io = b_pad * (pads[0] + pads[-1]) * 4                             # x slab + output slab
    vecs = 8 * sum(pads) * 4
    return act + weights + io + vecs


# ---------------------------------------------------------------------------
# Streaming per-layer kernel (grid over batch tiles, BN folded into next layer)
# ---------------------------------------------------------------------------

def _make_layer_kernel(normalize, is_hidden, tile_b, last_rows, use_bf16):
    """[scale/shift of previous BN] -> Linear -> [ReLU + whole-batch stats accum]."""
    needs_mask = last_rows < tile_b

    def kernel(*refs):
        if normalize:
            a_ref, ss_ref, w_ref, b_ref = refs[:4]
            out_refs = refs[4:]
        else:
            a_ref, w_ref, b_ref = refs[:3]
            out_refs = refs[3:]
        if is_hidden:
            out_ref, stats_ref = out_refs
        else:
            (out_ref,) = out_refs

        i = pl.program_id(0)

        a = a_ref[...].astype(jnp.float32)          # bf16 activation -> f32 (once)
        if normalize:
            # BatchNorm of the previous layer, pre-folded to scale/shift (2 ops/elem).
            a = a * ss_ref[0:1, :] + ss_ref[1:2, :]

        lhs = a.astype(jnp.bfloat16) if use_bf16 else a
        h = jnp.dot(lhs, w_ref[...], preferred_element_type=jnp.float32) + b_ref[...]

        if is_hidden:
            h = jnp.maximum(h, 0.0)                 # ReLU

            @pl.when(i == 0)
            def _():
                stats_ref[...] = jnp.zeros_like(stats_ref)

            def accum(hm):
                stats_ref[0:1, :] += jnp.sum(hm, axis=0, keepdims=True)
                stats_ref[1:2, :] += jnp.sum(hm * hm, axis=0, keepdims=True)

            if needs_mask:
                # Only the last batch tile can contain padded rows.
                is_last = i == pl.num_programs(0) - 1

                @pl.when(jnp.logical_not(is_last))
                def _():
                    accum(h)

                @pl.when(is_last)
                def _():
                    row = jax.lax.broadcasted_iota(jnp.int32, (tile_b, 1), 0)
                    accum(jnp.where(row < last_rows, h, 0.0))
            else:
                accum(h)

        out_ref[...] = h.astype(out_ref.dtype)

    return kernel


def _layer_vmem_limit(tile_b, in_pad, out_pad, act_bytes, w_bytes):
    # Resident blocks (weight/bias/scale-shift/stats) — count default double-buffering.
    resident = 2 * (in_pad * out_pad * w_bytes + (2 * in_pad + 3 * out_pad) * 4)
    # Streamed activation tiles, double-buffered (in: act dtype, out: worst case f32).
    streamed = 2 * tile_b * (in_pad * act_bytes + out_pad * 4)
    est = resident + streamed + (2 << 20)
    # <= 48 MiB: leave headroom on v7x (64 MiB physical VMEM).
    return int(min(max(2 * est, 24 << 20), 48 << 20))


def _layer_call(a, w_p, b_p, ss, *, is_hidden, batch, tile_b, use_bf16, act_dtype):
    b_rows, in_pad = a.shape
    out_pad = w_p.shape[1]
    num_tiles = b_rows // tile_b
    last_rows = batch - (num_tiles - 1) * tile_b
    normalize = ss is not None
    act_bytes = jnp.dtype(act_dtype).itemsize
    w_bytes = w_p.dtype.itemsize

    kernel = _make_layer_kernel(normalize, is_hidden, tile_b, last_rows, use_bf16)

    in_specs = [pl.BlockSpec((tile_b, in_pad), lambda i: (i, 0))]       # streamed tile
    args = [a]
    if normalize:
        in_specs.append(pl.BlockSpec((2, in_pad), lambda i: (0, 0)))    # resident scale/shift
        args.append(ss)
    in_specs.append(pl.BlockSpec((in_pad, out_pad), lambda i: (0, 0)))  # resident weight (bf16)
    args.append(w_p)
    in_specs.append(pl.BlockSpec((1, out_pad), lambda i: (0, 0)))       # resident bias
    args.append(b_p)

    if is_hidden:
        out_shape = (jax.ShapeDtypeStruct((b_rows, out_pad), act_dtype),
                     jax.ShapeDtypeStruct((2, out_pad), jnp.float32))
        out_specs = (pl.BlockSpec((tile_b, out_pad), lambda i: (i, 0)),
                     pl.BlockSpec((2, out_pad), lambda i: (0, 0)))      # resident accumulator
        semantics = ("arbitrary",)   # sequential stats accumulation
    else:
        out_shape = jax.ShapeDtypeStruct((b_rows, out_pad), jnp.float32)
        out_specs = pl.BlockSpec((tile_b, out_pad), lambda i: (i, 0))
        semantics = ("parallel",)

    return pl.pallas_call(
        kernel,
        out_shape=out_shape,
        grid=(num_tiles,),
        in_specs=in_specs,
        out_specs=out_specs,
        compiler_params=pltpu.CompilerParams(
            dimension_semantics=semantics,
            vmem_limit_bytes=_layer_vmem_limit(tile_b, in_pad, out_pad,
                                               act_bytes, w_bytes),
        ),
    )(*args)


def _bn_scale_shift(stats, gb_p, batch):
    """Fold whole-batch sum / sum-of-squares + gamma/beta into (scale; shift)."""
    # NOTE: single-pass var = E[h^2] - mean^2 (f32 accumulation); documented drift
    # vs torch's two-pass variance; the fused path uses an exact two-pass.
    inv_n = jnp.float32(1.0 / batch)
    mean = stats[0:1, :] * inv_n
    var = jnp.maximum(stats[1:2, :] * inv_n - mean * mean, 0.0)
    scale = gb_p[0:1, :] * jax.lax.rsqrt(var + BN_EPS)
    shift = gb_p[1:2, :] - mean * scale
    return jnp.concatenate([scale, shift], axis=0)


# ---------------------------------------------------------------------------
# Public forward
# ---------------------------------------------------------------------------

def leaf_embedding_mlp_forward(x, params, hidden_dims, output_dim, *,
                               tile_b=None, use_bf16=True, fuse=None):
    """Pallas forward pass of LeafEmbeddingMLP (torch training-mode BatchNorm1d).

    params: flat list, per hidden layer W (prev, hid), b (1, hid), gamma (1, hid),
    beta (1, hid); then W_out (prev, out), b_out (1, out).  Weights are stored
    transposed vs torch so that x @ W + b == F.linear(x, W_torch, b_torch).
    """
    batch, input_dim = x.shape
    num_hidden = len(hidden_dims)
    dims = [input_dim] + list(hidden_dims) + [output_dim]
    pads = [_round_up(d, LANE) for d in dims]

    act_dtype = jnp.bfloat16 if use_bf16 else jnp.float32
    w_dtype = jnp.bfloat16 if use_bf16 else jnp.float32
    act_bytes = 2 if use_bf16 else 4
    w_bytes = 2 if use_bf16 else 4

    # Pad parameters once (weights pre-cast to bf16 — no per-step casts in the kernel).
    padded = []
    idx = 0
    for layer in range(num_hidden):
        w, b, gamma, beta = params[idx:idx + 4]
        idx += 4
        in_pad, out_pad = pads[layer], pads[layer + 1]
        w_p = _pad_to(w, (in_pad, out_pad), w_dtype)
        b_p = _pad_to(jnp.reshape(b, (1, -1)), (1, out_pad))
        gb_p = _pad_to(jnp.concatenate([jnp.reshape(gamma, (1, -1)),
                                        jnp.reshape(beta, (1, -1))], axis=0),
                       (2, out_pad))
        padded.append((w_p, b_p, gb_p))
    w_out, b_out = params[idx:idx + 2]
    w_out_p = _pad_to(w_out, (pads[-2], pads[-1]), w_dtype)
    b_out_p = _pad_to(jnp.reshape(b_out, (1, -1)), (1, pads[-1]))

    # --- fully fused path ---------------------------------------------------
    b_pad_fused = _round_up(batch, 16)
    est = _fused_vmem_estimate(b_pad_fused, pads, w_bytes)
    if fuse is None:
        fuse = est <= FUSE_VMEM_BUDGET

    if fuse:
        x_slab = _pad_to(x, (b_pad_fused, pads[0]), act_dtype)
        flat = []
        for w_p, b_p, gb_p in padded:
            flat.extend([w_p, b_p, gb_p])
        flat.extend([w_out_p, b_out_p])
        kernel = _make_fused_kernel(num_hidden, batch, b_pad_fused, use_bf16)
        limit = int(min(max(2 * est + (2 << 20), 16 << 20), 48 << 20))
        out = pl.pallas_call(
            kernel,
            out_shape=jax.ShapeDtypeStruct((b_pad_fused, pads[-1]), jnp.float32),
            compiler_params=pltpu.CompilerParams(vmem_limit_bytes=limit),
        )(x_slab, *flat)
        return out[:batch, :output_dim]

    # --- streaming per-layer path --------------------------------------------
    if tile_b is None:
        # VMEM-budgeted batch tile: ~8 MiB of (double-buffered) streamed bytes per step.
        per_row = 2 * (max(pads[:-1]) * act_bytes + max(pads[1:]) * 4)
        tile_b = (8 << 20) // max(per_row, 1)
    tile_b = int(max(16, min(tile_b, 4096)))
    tile_b = min(tile_b, _round_up(batch, 16))
    tile_b = _round_up(tile_b, 16)
    b_pad = _round_up(batch, tile_b)

    a = _pad_to(x, (b_pad, pads[0]), act_dtype)
    ss = None
    for layer in range(num_hidden):
        w_p, b_p, gb_p = padded[layer]
        a, stats = _layer_call(a, w_p, b_p, ss, is_hidden=True, batch=batch,
                               tile_b=tile_b, use_bf16=use_bf16, act_dtype=act_dtype)
        # Fold BN into a (2, out_pad) scale/shift, computed once between calls.
        ss = _bn_scale_shift(stats, gb_p, batch)
    out = _layer_call(a, w_out_p, b_out_p, ss, is_hidden=False, batch=batch,
                      tile_b=tile_b, use_bf16=use_bf16, act_dtype=act_dtype)
    return out[:batch, :output_dim]


# ---------------------------------------------------------------------------
# Init + pure-JAX reference
# ---------------------------------------------------------------------------

def init_params(key, input_dim, hidden_dims, output_dim):
    """Deterministic PyTorch-style (Kaiming-uniform-ish) parameter init."""
    params = []
    prev_dim = input_dim
    for hidden_dim in hidden_dims:
        key, kw, kb = jax.random.split(key, 3)
        bound = 1.0 / jnp.sqrt(prev_dim)
        w = jax.random.uniform(kw, (prev_dim, hidden_dim), jnp.float32, -bound, bound)
        b = jax.random.uniform(kb, (1, hidden_dim), jnp.float32, -bound, bound)
        gamma = jnp.ones((1, hidden_dim), jnp.float32)
        beta = jnp.zeros((1, hidden_dim), jnp.float32)
        params.extend([w, b, gamma, beta])
        prev_dim = hidden_dim
    key, kw, kb = jax.random.split(key, 3)
    bound = 1.0 / jnp.sqrt(prev_dim)
    w_out = jax.random.uniform(kw, (prev_dim, output_dim), jnp.float32, -bound, bound)
    b_out = jax.random.uniform(kb, (1, output_dim), jnp.float32, -bound, bound)
    params.extend([w_out, b_out])
    return params


def reference_forward(x, params, num_hidden, use_bf16=False):
    """Pure-JAX reference (torch training-mode BatchNorm1d semantics)."""
    def mm(a, w):
        if use_bf16:
            return jnp.dot(a.astype(jnp.bfloat16), w.astype(jnp.bfloat16),
                           preferred_element_type=jnp.float32)
        return jnp.dot(a, w, preferred_element_type=jnp.float32)

    h = x
    idx = 0
    for _ in range(num_hidden):
        w, b, gamma, beta = params[idx:idx + 4]
        idx += 4
        h = jnp.maximum(mm(h, w) + b, 0.0)
        mean = jnp.mean(h, axis=0, keepdims=True)
        var = jnp.mean((h - mean) ** 2, axis=0, keepdims=True)
        h = (h - mean) * jax.lax.rsqrt(var + BN_EPS) * gamma + beta
    w_out, b_out = params[idx], params[idx + 1]
    return mm(h, w_out) + b_out


if __name__ == "__main__":
    input_dim = 16
    hidden_dims = [32, 32]
    output_dim = 8
    num_hidden = len(hidden_dims)

    key = jax.random.PRNGKey(0)
    key, kx = jax.random.split(key)
    params = init_params(key, input_dim, hidden_dims, output_dim)

    # --- 1) Fully fused path (small batch; padded rows exercise the stats mask) ---
    batch = 50
    x = jax.random.normal(kx, (batch, input_dim), jnp.float32)
    out = leaf_embedding_mlp_forward(x, params, hidden_dims, output_dim, use_bf16=True)
    out = jax.block_until_ready(out)
    assert out.shape == (batch, output_dim)
    ref16 = reference_forward(x, params, num_hidden, use_bf16=True)
    ref32 = reference_forward(x, params, num_hidden, use_bf16=False)
    assert jnp.allclose(out, ref16, atol=2e-2, rtol=2e-2), "fused: mismatch vs bf16 ref"
    assert jnp.allclose(out, ref32, atol=1e-1, rtol=1e-1), "fused: mismatch vs f32 ref"

    # --- 2) Streaming per-layer path (forced), partial last batch tile ---
    key, kx2 = jax.random.split(key)
    batch2 = 200
    x2 = jax.random.normal(kx2, (batch2, input_dim), jnp.float32)
    out2 = leaf_embedding_mlp_forward(x2, params, hidden_dims, output_dim,
                                      tile_b=64, use_bf16=True, fuse=False)
    out2 = jax.block_until_ready(out2)
    assert out2.shape == (batch2, output_dim)
    ref16_2 = reference_forward(x2, params, num_hidden, use_bf16=True)
    ref32_2 = reference_forward(x2, params, num_hidden, use_bf16=False)
    assert jnp.allclose(out2, ref16_2, atol=2e-2, rtol=2e-2), "stream: mismatch vs bf16 ref"
    assert jnp.allclose(out2, ref32_2, atol=1e-1, rtol=1e-1), "stream: mismatch vs f32 ref"

    print("KERNEL_OK")
</pallas_src>

<mosaic_0001>
module attributes {stable_mosaic.version = 11 : i64} {
  func.func @kernel(%arg0: memref<64x128xbf16, #tpu.memory_space<vmem>>, %arg1: memref<128x128xbf16, #tpu.memory_space<vmem>>, %arg2: memref<1x128xf32, #tpu.memory_space<vmem>>, %arg3: memref<2x128xf32, #tpu.memory_space<vmem>>, %arg4: memref<128x128xbf16, #tpu.memory_space<vmem>>, %arg5: memref<1x128xf32, #tpu.memory_space<vmem>>, %arg6: memref<2x128xf32, #tpu.memory_space<vmem>>, %arg7: memref<128x128xbf16, #tpu.memory_space<vmem>>, %arg8: memref<1x128xf32, #tpu.memory_space<vmem>>, %arg9: memref<64x128xf32, #tpu.memory_space<vmem>>) attributes {dimension_semantics = [], scalar_prefetch = 0 : i64, scratch_operands = 0 : i64, tpu.core_type = #tpu.core_type<tc>} {
    %c0 = arith.constant 0 : index
    %c0_0 = arith.constant 0 : index
    %0 = vector.load %arg0[%c0, %c0_0] : memref<64x128xbf16, #tpu.memory_space<vmem>>, vector<64x128xbf16>
    %1 = arith.extf %0 : vector<64x128xbf16> to vector<64x128xf32>
    %2 = tpu.iota {dimensions = array<i32: 0>} : vector<64x1xi32>
    %c50_i32 = arith.constant 50 : i32
    %3 = vector.broadcast %c50_i32 : i32 to vector<64x1xi32>
    %4 = arith.cmpi slt, %2, %3 : vector<64x1xi32>
    %5 = arith.truncf %1 : vector<64x128xf32> to vector<64x128xbf16>
    %c0_1 = arith.constant 0 : index
    %c0_2 = arith.constant 0 : index
    %6 = vector.load %arg1[%c0_1, %c0_2] : memref<128x128xbf16, #tpu.memory_space<vmem>>, vector<128x128xbf16>
    %cst = arith.constant dense<0.000000e+00> : vector<64x128xf32>
    %7 = tpu.matmul %5, %6, %cst {dimension_numbers = #tpu.dot_dimension_numbers<[1], [0], [0], [1], [0, 0, 1, 1], [], []>} : vector<64x128xbf16>, vector<128x128xbf16>, vector<64x128xf32> -> vector<64x128xf32>
    %c0_3 = arith.constant 0 : index
    %c0_4 = arith.constant 0 : index
    %8 = vector.load %arg2[%c0_3, %c0_4] : memref<1x128xf32, #tpu.memory_space<vmem>>, vector<1x128xf32>
    %9 = vector.broadcast %8 : vector<1x128xf32> to vector<64x128xf32>
    %10 = arith.addf %7, %9 : vector<64x128xf32>
    %cst_5 = arith.constant 0.000000e+00 : f32
    %11 = vector.broadcast %cst_5 : f32 to vector<64x128xf32>
    %12 = arith.maximumf %10, %11 : vector<64x128xf32>
    %cst_6 = arith.constant 0.000000e+00 : f32
    %13 = vector.shape_cast %4 : vector<64x1xi1> to vector<64x1xi1>
    %14 = vector.broadcast %13 : vector<64x1xi1> to vector<64x128xi1>
    %15 = vector.broadcast %cst_6 : f32 to vector<64x128xf32>
    %16 = arith.select %14, %12, %15 : vector<64x128xi1>, vector<64x128xf32>
    %cst_7 = arith.constant dense<0.000000e+00> : vector<128xf32>
    %17 = vector.multi_reduction <add>, %16, %cst_7 [0] : vector<64x128xf32> to vector<128xf32>
    %18 = vector.shape_cast %17 : vector<128xf32> to vector<1x128xf32>
    %cst_8 = arith.constant 2.000000e-02 : f32
    %19 = vector.broadcast %cst_8 : f32 to vector<1x128xf32>
    %20 = arith.mulf %18, %19 : vector<1x128xf32>
    %21 = vector.broadcast %20 : vector<1x128xf32> to vector<64x128xf32>
    %22 = arith.subf %12, %21 : vector<64x128xf32>
    %cst_9 = arith.constant 0.000000e+00 : f32
    %23 = vector.shape_cast %4 : vector<64x1xi1> to vector<64x1xi1>
    %24 = vector.broadcast %23 : vector<64x1xi1> to vector<64x128xi1>
    %25 = vector.broadcast %cst_9 : f32 to vector<64x128xf32>
    %26 = arith.select %24, %22, %25 : vector<64x128xi1>, vector<64x128xf32>
    %27 = arith.mulf %26, %26 : vector<64x128xf32>
    %cst_10 = arith.constant dense<0.000000e+00> : vector<128xf32>
    %28 = vector.multi_reduction <add>, %27, %cst_10 [0] : vector<64x128xf32> to vector<128xf32>
    %29 = vector.shape_cast %28 : vector<128xf32> to vector<1x128xf32>
    %cst_11 = arith.constant 2.000000e-02 : f32
    %30 = vector.broadcast %cst_11 : f32 to vector<1x128xf32>
    %31 = arith.mulf %29, %30 : vector<1x128xf32>
    %c0_12 = arith.constant 0 : index
    %c0_13 = arith.constant 0 : index
    %32 = vector.load %arg3[%c0_12, %c0_13] : memref<2x128xf32, #tpu.memory_space<vmem>>, vector<1x128xf32>
    %cst_14 = arith.constant 9.99999974E-6 : f32
    %33 = vector.broadcast %cst_14 : f32 to vector<1x128xf32>
    %34 = arith.addf %31, %33 : vector<1x128xf32>
    %35 = math.rsqrt %34 : vector<1x128xf32>
    %36 = arith.mulf %32, %35 : vector<1x128xf32>
    %c1 = arith.constant 1 : index
    %c0_15 = arith.constant 0 : index
    %37 = vector.load %arg3[%c1, %c0_15] : memref<2x128xf32, #tpu.memory_space<vmem>>, vector<1x128xf32>
    %38 = arith.mulf %20, %36 : vector<1x128xf32>
    %39 = arith.subf %37, %38 : vector<1x128xf32>
    %40 = vector.broadcast %36 : vector<1x128xf32> to vector<64x128xf32>
    %41 = arith.mulf %12, %40 : vector<64x128xf32>
    %42 = vector.broadcast %39 : vector<1x128xf32> to vector<64x128xf32>
    %43 = arith.addf %41, %42 : vector<64x128xf32>
    %44 = arith.truncf %43 : vector<64x128xf32> to vector<64x128xbf16>
    %c0_16 = arith.constant 0 : index
    %c0_17 = arith.constant 0 : index
    %45 = vector.load %arg4[%c0_16, %c0_17] : memref<128x128xbf16, #tpu.memory_space<vmem>>, vector<128x128xbf16>
    %cst_18 = arith.constant dense<0.000000e+00> : vector<64x128xf32>
    %46 = tpu.matmul %44, %45, %cst_18 {dimension_numbers = #tpu.dot_dimension_numbers<[1], [0], [0], [1], [0, 0, 1, 1], [], []>} : vector<64x128xbf16>, vector<128x128xbf16>, vector<64x128xf32> -> vector<64x128xf32>
    %c0_19 = arith.constant 0 : index
    %c0_20 = arith.constant 0 : index
    %47 = vector.load %arg5[%c0_19, %c0_20] : memref<1x128xf32, #tpu.memory_space<vmem>>, vector<1x128xf32>
    %48 = vector.broadcast %47 : vector<1x128xf32> to vector<64x128xf32>
    %49 = arith.addf %46, %48 : vector<64x128xf32>
    %cst_21 = arith.constant 0.000000e+00 : f32
    %50 = vector.broadcast %cst_21 : f32 to vector<64x128xf32>
    %51 = arith.maximumf %49, %50 : vector<64x128xf32>
    %cst_22 = arith.constant 0.000000e+00 : f32
    %52 = vector.shape_cast %4 : vector<64x1xi1> to vector<64x1xi1>
    %53 = vector.broadcast %52 : vector<64x1xi1> to vector<64x128xi1>
    %54 = vector.broadcast %cst_22 : f32 to vector<64x128xf32>
    %55 = arith.select %53, %51, %54 : vector<64x128xi1>, vector<64x128xf32>
    %cst_23 = arith.constant dense<0.000000e+00> : vector<128xf32>
    %56 = vector.multi_reduction <add>, %55, %cst_23 [0] : vector<64x128xf32> to vector<128xf32>
    %57 = vector.shape_cast %56 : vector<128xf32> to vector<1x128xf32>
    %cst_24 = arith.constant 2.000000e-02 : f32
    %58 = vector.broadcast %cst_24 : f32 to vector<1x128xf32>
    %59 = arith.mulf %57, %58 : vector<1x128xf32>
    %60 = vector.broadcast %59 : vector<1x128xf32> to vector<64x128xf32>
    %61 = arith.subf %51, %60 : vector<64x128xf32>
    %cst_25 = arith.constant 0.000000e+00 : f32
    %62 = vector.shape_cast %4 : vector<64x1xi1> to vector<64x1xi1>
    %63 = vector.broadcast %62 : vector<64x1xi1> to vector<64x128xi1>
    %64 = vector.broadcast %cst_25 : f32 to vector<64x128xf32>
    %65 = arith.select %63, %61, %64 : vector<64x128xi1>, vector<64x128xf32>
    %66 = arith.mulf %65, %65 : vector<64x128xf32>
    %cst_26 = arith.constant dense<0.000000e+00> : vector<128xf32>
    %67 = vector.multi_reduction <add>, %66, %cst_26 [0] : vector<64x128xf32> to vector<128xf32>
    %68 = vector.shape_cast %67 : vector<128xf32> to vector<1x128xf32>
    %cst_27 = arith.constant 2.000000e-02 : f32
    %69 = vector.broadcast %cst_27 : f32 to vector<1x128xf32>
    %70 = arith.mulf %68, %69 : vector<1x128xf32>
    %c0_28 = arith.constant 0 : index
    %c0_29 = arith.constant 0 : index
    %71 = vector.load %arg6[%c0_28, %c0_29] : memref<2x128xf32, #tpu.memory_space<vmem>>, vector<1x128xf32>
    %cst_30 = arith.constant 9.99999974E-6 : f32
    %72 = vector.broadcast %cst_30 : f32 to vector<1x128xf32>
    %73 = arith.addf %70, %72 : vector<1x128xf32>
    %74 = math.rsqrt %73 : vector<1x128xf32>
    %75 = arith.mulf %71, %74 : vector<1x128xf32>
    %c1_31 = arith.constant 1 : index
    %c0_32 = arith.constant 0 : index
    %76 = vector.load %arg6[%c1_31, %c0_32] : memref<2x128xf32, #tpu.memory_space<vmem>>, vector<1x128xf32>
    %77 = arith.mulf %59, %75 : vector<1x128xf32>
    %78 = arith.subf %76, %77 : vector<1x128xf32>
    %79 = vector.broadcast %75 : vector<1x128xf32> to vector<64x128xf32>
    %80 = arith.mulf %51, %79 : vector<64x128xf32>
    %81 = vector.broadcast %78 : vector<1x128xf32> to vector<64x128xf32>
    %82 = arith.addf %80, %81 : vector<64x128xf32>
    %83 = arith.truncf %82 : vector<64x128xf32> to vector<64x128xbf16>
    %c0_33 = arith.constant 0 : index
    %c0_34 = arith.constant 0 : index
    %84 = vector.load %arg7[%c0_33, %c0_34] : memref<128x128xbf16, #tpu.memory_space<vmem>>, vector<128x128xbf16>
    %cst_35 = arith.constant dense<0.000000e+00> : vector<64x128xf32>
    %85 = tpu.matmul %83, %84, %cst_35 {dimension_numbers = #tpu.dot_dimension_numbers<[1], [0], [0], [1], [0, 0, 1, 1], [], []>} : vector<64x128xbf16>, vector<128x128xbf16>, vector<64x128xf32> -> vector<64x128xf32>
    %c0_36 = arith.constant 0 : index
    %c0_37 = arith.constant 0 : index
    %86 = vector.load %arg8[%c0_36, %c0_37] : memref<1x128xf32, #tpu.memory_space<vmem>>, vector<1x128xf32>
    %87 = vector.broadcast %86 : vector<1x128xf32> to vector<64x128xf32>
    %88 = arith.addf %85, %87 : vector<64x128xf32>
    %c0_38 = arith.constant 0 : index
    %c0_39 = arith.constant 0 : index
    %89 = vector.load %arg9[%c0_38, %c0_39] : memref<64x128xf32, #tpu.memory_space<vmem>>, vector<64x128xf32>
    tpu.vector_store %arg9[%c0_38, %c0_39], %88 {strides = array<i32>} : memref<64x128xf32, #tpu.memory_space<vmem>>, vector<64x128xf32>,
    return
  }
}

</mosaic_0001>

<llo_original>
// kernel: tpu_custom_call.1
$region0: #{tpu_custom_call.1}
  #allocation0 [shape = 'u32[]', space=smem, size = 0x4, offset = 0x4, fixed_abs, tag = 'smem constant byte address 0x4 - core index']
  #allocation1 [shape = 'u32[144,128]{1,0:T(1,128)}', space=vmem, size = 0x12000, scoped, tag = 'internal scratch']
  %s0 = inlined_call_operand.hbm [shape: bf16[64,128], index: 0, kind: input, shape index: {}]
  %s1 = inlined_call_operand.hbm [shape: bf16[128,128], index: 1, kind: input, shape index: {}]
  %s2 = inlined_call_operand.vmem [shape: f32[1,128], index: 2, kind: input, shape index: {}]
  %s3 = inlined_call_operand.vmem [shape: f32[2,128], index: 3, kind: input, shape index: {}]
  %s4 = inlined_call_operand.hbm [shape: bf16[128,128], index: 4, kind: input, shape index: {}]
  %s5 = inlined_call_operand.vmem [shape: f32[1,128], index: 5, kind: input, shape index: {}]
  %s6 = inlined_call_operand.vmem [shape: f32[2,128], index: 6, kind: input, shape index: {}]
  %s7 = inlined_call_operand.hbm [shape: bf16[128,128], index: 7, kind: input, shape index: {}]
  %s8 = inlined_call_operand.vmem [shape: f32[1,128], index: 8, kind: input, shape index: {}]
  %s9 = inlined_call_operand.hbm [shape: f32[64,128], index: 9, kind: output, shape index: {}]
  %s10 = sld [smem:[#allocation0]]
  $region62: #{tpu_custom_call.1} parent=0
    _
  %s12 = ssub.s32 1, %s10
  %s13 = scalar_select 0, %s12, %s10
  $region1: #{tpu_custom_call.1} parent=0
    #allocation2 [shape = 'u8[16384]{0}', space=vmem, size = 0x4000, scoped, tag = 'input window, operand 0, single buffered']
    #allocation3 [shape = 's32[1]{0}', space=sflag, size = 0x4, scoped, tag = 'scoped memory for tpu_custom_call.1']
    #allocation4 [shape = 's32[1]{0}', space=sflag, size = 0x4, scoped, tag = 'scoped memory for tpu_custom_call.1']
    #allocation5 [shape = 'u8[32768]{0}', space=vmem, size = 0x8000, scoped, tag = 'input window, operand 1, single buffered']
    #allocation6 [shape = 's32[1]{0}', space=sflag, size = 0x4, scoped, tag = 'scoped memory for tpu_custom_call.1']
    #allocation7 [shape = 'u8[32768]{0}', space=vmem, size = 0x8000, scoped, tag = 'input window, operand 4, single buffered']
    #allocation8 [shape = 'u8[32768]{0}', space=vmem, size = 0x8000, scoped, tag = 'input window, operand 7, single buffered']
    #allocation9 [shape = 's32[1]{0}', space=sflag, size = 0x4, scoped, tag = 'scoped memory for tpu_custom_call.1']
    #allocation10 [shape = 'u8[32768]{0}', space=vmem, size = 0x8000, scoped, tag = 'output window, operand 0, single buffered']
    %14 = vsyncpa [#allocation3], 0
    %15 = vsyncpa [#allocation6], 0
    %16 = vsyncpa [#allocation9], 0
    %17 = vsyncpa [#allocation4], 0
    // Predicated region
    $region2: #{tpu_custom_call.1} parent=1 // pred_check
      _
    $region3: #{tpu_custom_call.1} parent=1 // pred_check_branch
      %19 = sbr.rel (0) target = $region5
    $region4: #{tpu_custom_call.1} parent=1 // pred_region
      %s21 = ssub.s32 512, 512
      %22 = vsyncadd [#allocation3], %s21
      %s23 = sshll.u32 [#allocation2], 4
      %s24 = int_to_ptr.vmem [resolvable:$true] %s23
      %29 = dma.hbm_to_vmem [thread:$0]  %s0, 512, %s24, [#allocation3], 64, 64, 4
    $region5: #{tpu_custom_call.1} parent=1 // pred_fallthru
      _
    // Predicated region
    $region6: #{tpu_custom_call.1} parent=1 // pred_check
      _
    $region7: #{tpu_custom_call.1} parent=1 // pred_check_branch
      %31 = sbr.rel (0) target = $region9
    $region8: #{tpu_custom_call.1} parent=1 // pred_region
      %s33 = ssub.s32 1024, 1024
      %34 = vsyncadd [#allocation6], %s33
      %s35 = sshll.u32 [#allocation5], 4
      %s36 = int_to_ptr.vmem [resolvable:$true] %s35
      %41 = dma.hbm_to_vmem [thread:$0]  %s1, 1024, %s36, [#allocation6], 64, 64, 4
    $region9: #{tpu_custom_call.1} parent=1 // pred_fallthru
      _
    // Predicated region
    $region10: #{tpu_custom_call.1} parent=1 // pred_check
      _
    $region11: #{tpu_custom_call.1} parent=1 // pred_check_branch
      %43 = sbr.rel (0) target = $region13
    $region12: #{tpu_custom_call.1} parent=1 // pred_region
      _
    $region13: #{tpu_custom_call.1} parent=1 // pred_fallthru
      _
    // Predicated region
    $region14: #{tpu_custom_call.1} parent=1 // pred_check
      _
    $region15: #{tpu_custom_call.1} parent=1 // pred_check_branch
      %45 = sbr.rel (0) target = $region17
    $region16: #{tpu_custom_call.1} parent=1 // pred_region
      _
    $region17: #{tpu_custom_call.1} parent=1 // pred_fallthru
      _
    // Predicated region
    $region18: #{tpu_custom_call.1} parent=1 // pred_check
      _
    $region19: #{tpu_custom_call.1} parent=1 // pred_check_branch
      %47 = sbr.rel (0) target = $region21
    $region20: #{tpu_custom_call.1} parent=1 // pred_region
      %s49 = ssub.s32 1024, 1024
      %50 = vsyncadd [#allocation6], %s49
      %s51 = sshll.u32 [#allocation7], 4
      %s52 = int_to_ptr.vmem [resolvable:$true] %s51
      %57 = dma.hbm_to_vmem [thread:$0]  %s4, 1024, %s52, [#allocation6], 64, 64, 4
    $region21: #{tpu_custom_call.1} parent=1 // pred_fallthru
      _
    // Predicated region
    $region22: #{tpu_custom_call.1} parent=1 // pred_check
      _
    $region23: #{tpu_custom_call.1} parent=1 // pred_check_branch
      %59 = sbr.rel (0) target = $region25
    $region24: #{tpu_custom_call.1} parent=1 // pred_region
      _
    $region25: #{tpu_custom_call.1} parent=1 // pred_fallthru
      _
    // Predicated region
    $region26: #{tpu_custom_call.1} parent=1 // pred_check
      _
    $region27: #{tpu_custom_call.1} parent=1 // pred_check_branch
      %61 = sbr.rel (0) target = $region29
    $region28: #{tpu_custom_call.1} parent=1 // pred_region
      _
    $region29: #{tpu_custom_call.1} parent=1 // pred_fallthru
      _
    // Predicated region
    $region30: #{tpu_custom_call.1} parent=1 // pred_check
      _
    $region31: #{tpu_custom_call.1} parent=1 // pred_check_branch
      %63 = sbr.rel (0) target = $region33
    $region32: #{tpu_custom_call.1} parent=1 // pred_region
      %s65 = ssub.s32 1024, 1024
      %66 = vsyncadd [#allocation9], %s65
      %s67 = sshll.u32 [#allocation8], 4
      %s68 = int_to_ptr.vmem [resolvable:$true] %s67
      %73 = dma.hbm_to_vmem [thread:$0]  %s7, 1024, %s68, [#allocation9], 64, 64, 4
    $region33: #{tpu_custom_call.1} parent=1 // pred_fallthru
      _
    // Predicated region
    $region34: #{tpu_custom_call.1} parent=1 // pred_check
      _
    $region35: #{tpu_custom_call.1} parent=1 // pred_check_branch
      %75 = sbr.rel (0) target = $region37
    $region36: #{tpu_custom_call.1} parent=1 // pred_region
      _
    $region37: #{tpu_custom_call.1} parent=1 // pred_fallthru
      _
    // Predicated region
    $region38: #{tpu_custom_call.1} parent=1 // pred_check
      _
    $region39: #{tpu_custom_call.1} parent=1 // pred_check_branch
      %77 = sbr.rel (0) target = $region41
    $region40: #{tpu_custom_call.1} parent=1 // pred_region
      %78 = dma.done [#allocation3], 512
    $region41: #{tpu_custom_call.1} parent=1 // pred_fallthru
      _
    // Predicated region
    $region42: #{tpu_custom_call.1} parent=1 // pred_check
      _
    $region43: #{tpu_custom_call.1} parent=1 // pred_check_branch
      %80 = sbr.rel (0) target = $region45
    $region44: #{tpu_custom_call.1} parent=1 // pred_region
      %81 = dma.done [#allocation6], 1024
    $region45: #{tpu_custom_call.1} parent=1 // pred_fallthru
      _
    // Predicated region
    $region46: #{tpu_custom_call.1} parent=1 // pred_check
      _
    $region47: #{tpu_custom_call.1} parent=1 // pred_check_branch
      %83 = sbr.rel (0) target = $region49
    $region48: #{tpu_custom_call.1} parent=1 // pred_region
      %84 = dma.done [#allocation6], 1024
    $region49: #{tpu_custom_call.1} parent=1 // pred_fallthru
      _
    // Predicated region
    $region50: #{tpu_custom_call.1} parent=1 // pred_check
      _
    $region51: #{tpu_custom_call.1} parent=1 // pred_check_branch
      %86 = sbr.rel (0) target = $region53
    $region52: #{tpu_custom_call.1} parent=1 // pred_region
      %87 = dma.done [#allocation9], 1024
    $region53: #{tpu_custom_call.1} parent=1 // pred_fallthru
      _
    %v89 = vld [vmem:[#allocation2] sm:$0xf]
    %v90 = vld [vmem:[#allocation2 + $0x4] sm:$0xf]
    %v91 = vld [vmem:[#allocation2 + $0x8] sm:$0xf]
    %v92 = vld [vmem:[#allocation2 + $0xc] sm:$0xf]
    %v93 = vld [vmem:[#allocation2 + $0x10] sm:$0xf]
    %v94 = vld [vmem:[#allocation2 + $0x14] sm:$0xf]
    %v95 = vld [vmem:[#allocation2 + $0x18] sm:$0xf]
    %v96 = vld [vmem:[#allocation2 + $0x1c] sm:$0xf]
    %v97 = vlaneseq
    %v98 = vshrl.u32 %v97, 7
    %v99 = vadd.s32 %v98, 8
    %v100 = vadd.s32 %v98, 16
    %v101 = vadd.s32 %v98, 24
    %v102 = vadd.s32 %v98, 32
    %v103 = vadd.s32 %v98, 40
    %v104 = vadd.s32 %v98, 48
    %v105 = vadd.s32 %v98, 56
    %vm106 = vcmp.lt.s32.totalorder %v98, 50
    %vm107 = vcmp.lt.s32.totalorder %v99, 50
    %vm108 = vcmp.lt.s32.totalorder %v100, 50
    %vm109 = vcmp.lt.s32.totalorder %v101, 50
    %vm110 = vcmp.lt.s32.totalorder %v102, 50
    %vm111 = vcmp.lt.s32.totalorder %v103, 50
    %vm112 = vcmp.lt.s32.totalorder %v104, 50
    %vm113 = vcmp.lt.s32.totalorder %v105, 50
    %v114 = vld [vmem:[#allocation5] sm:$0xf]
    %v115 = vld [vmem:[#allocation5 + $0x4] sm:$0xf]
    %v116 = vld [vmem:[#allocation5 + $0x8] sm:$0xf]
    %v117 = vld [vmem:[#allocation5 + $0xc] sm:$0xf]
    %v118 = vld [vmem:[#allocation5 + $0x10] sm:$0xf]
    %v119 = vld [vmem:[#allocation5 + $0x14] sm:$0xf]
    %v120 = vld [vmem:[#allocation5 + $0x18] sm:$0xf]
    %v121 = vld [vmem:[#allocation5 + $0x1c] sm:$0xf]
    %v122 = vld [vmem:[#allocation5 + $0x20] sm:$0xf]
    %v123 = vld [vmem:[#allocation5 + $0x24] sm:$0xf]
    %v124 = vld [vmem:[#allocation5 + $0x28] sm:$0xf]
    %v125 = vld [vmem:[#allocation5 + $0x2c] sm:$0xf]
    %v126 = vld [vmem:[#allocation5 + $0x30] sm:$0xf]
    %v127 = vld [vmem:[#allocation5 + $0x34] sm:$0xf]
    %v128 = vld [vmem:[#allocation5 + $0x38] sm:$0xf]
    %v129 = vld [vmem:[#allocation5 + $0x3c] sm:$0xf]
    %v130 = vld [vmem:[%s2] sm:$0x1]
    %v132 = vlaneseq
    %v133 = vshrl.u32 %v132, 7
    %v134 = vsub.s32 0, %v133
    %v135 = vrot.slane %v130, %v134
    %v145 = vunpack.c.l.b16 %v89
    %v146 = vunpack.c.l.b16 %v90
    %v147 = vunpack.c.l.b16 %v91
    %v148 = vunpack.c.l.b16 %v92
    %v149 = vunpack.c.l.b16 %v93
    %v150 = vunpack.c.l.b16 %v94
    %v151 = vunpack.c.l.b16 %v95
    %v152 = vunpack.c.l.b16 %v96
    %v153 = vpack.c.b16 %v146, %v145
    %v154 = vpack.c.b16 %v148, %v147
    %v155 = vpack.c.b16 %v150, %v149
    %v156 = vpack.c.b16 %v152, %v151
    %v177 = vunpack.c.l.b16 %v114
    %v178 = vunpack.c.l.b16 %v115
    %v179 = vunpack.c.l.b16 %v116
    %v180 = vunpack.c.l.b16 %v117
    %v181 = vunpack.c.l.b16 %v118
    %v182 = vunpack.c.l.b16 %v119
    %v183 = vunpack.c.l.b16 %v120
    %v184 = vunpack.c.l.b16 %v121
    %v185 = vunpack.c.l.b16 %v122
    %v186 = vunpack.c.l.b16 %v123
    %v187 = vunpack.c.l.b16 %v124
    %v188 = vunpack.c.l.b16 %v125
    %v189 = vunpack.c.l.b16 %v126
    %v190 = vunpack.c.l.b16 %v127
    %v191 = vunpack.c.l.b16 %v128
    %v192 = vunpack.c.l.b16 %v129
    %v193 = vpack.c.b16 %v178, %v177
    %v194 = vpack.c.b16 %v180, %v179
    %v195 = vpack.c.b16 %v182, %v181
    %v196 = vpack.c.b16 %v184, %v183
    %v197 = vpack.c.b16 %v186, %v185
    %v198 = vpack.c.b16 %v188, %v187
    %v199 = vpack.c.b16 %v190, %v189
    %v200 = vpack.c.b16 %v192, %v191
    %209 = vmatprep.subr.bf16.mxu0 0
    %210 = vmatpush1.bf16.msra.mxu0 %v193
    %211 = vmatprep.subr.bf16.mxu0 0
    %212 = vmatpush1.bf16.msra.mxu0 %v194
    %213 = vmatprep.subr.bf16.mxu0 0
    %214 = vmatpush1.bf16.msra.mxu0 %v195
    %215 = vmatprep.subr.bf16.mxu0 0
    %216 = vmatpush1.bf16.msra.mxu0 %v196
    %217 = vmatprep.subr.bf16.mxu0 0
    %218 = vmatpush1.bf16.msra.mxu0 %v197
    %219 = vmatprep.subr.bf16.mxu0 0
    %220 = vmatpush1.bf16.msra.mxu0 %v198
    %221 = vmatprep.subr.bf16.mxu0 0
    %222 = vmatpush1.bf16.msra.mxu0 %v199
    %223 = vmatprep.subr.bf16.mxu0 0
    %224 = vmatpush1.bf16.msra.mxu0 %v200
    %225 = vmatprep.subr.bf16.mxu0 0
    %226 = vmatpush1.bf16.msra.mxu0 0
    %227 = vmatprep.subr.bf16.mxu0 0
    %228 = vmatpush1.bf16.msra.mxu0 0
    %229 = vmatprep.subr.bf16.mxu0 0
    %230 = vmatpush1.bf16.msra.mxu0 0
    %231 = vmatprep.subr.bf16.mxu0 0
    %232 = vmatpush1.bf16.msra.mxu0 0
    %233 = vmatprep.subr.bf16.mxu0 0
    %234 = vmatpush1.bf16.msra.mxu0 0
    %235 = vmatprep.subr.bf16.mxu0 0
    %236 = vmatpush1.bf16.msra.mxu0 0
    %237 = vmatprep.subr.bf16.mxu0 0
    %238 = vmatpush1.bf16.msra.mxu0 0
    %239 = vmatprep.subr.bf16.mxu0 0
    %240 = vmatpush1.bf16.msra.mxu0 0
    %241 = vmatprep.mubr.bf16.mxu0 0
    %242 = vmatmul.mubr.bf16.gmra.mrb[0].mxu0 %v153
    %v243 = vpop.f32.mrb[0].mxu0
    %v244 = vadd.f32 %v135, %v243
    %v245 = vpop.f32.mrb[0].mxu0
    %v246 = vpop.f32.mrb[0].mxu0
    %v247 = vadd.f32 %v135, %v246
    %v248 = vpop.f32.mrb[0].mxu0
    %249 = vmatprep.mubr.bf16.mxu0 0
    %250 = vmatmul.mubr.bf16.gmra.mrb[0].mxu0 %v154
    %v251 = vpop.f32.mrb[0].mxu0
    %v252 = vadd.f32 %v135, %v251
    %v253 = vpop.f32.mrb[0].mxu0
    %v254 = vpop.f32.mrb[0].mxu0
    %v255 = vadd.f32 %v135, %v254
    %v256 = vpop.f32.mrb[0].mxu0
    %257 = vmatprep.mubr.bf16.mxu0 0
    %258 = vmatmul.mubr.bf16.gmra.mrb[0].mxu0 %v155
    %v259 = vpop.f32.mrb[0].mxu0
    %v260 = vadd.f32 %v135, %v259
    %v261 = vpop.f32.mrb[0].mxu0
    %v262 = vpop.f32.mrb[0].mxu0
    %v263 = vadd.f32 %v135, %v262
    %v264 = vpop.f32.mrb[0].mxu0
    %265 = vmatprep.mubr.bf16.mxu0 0
    %266 = vmatmul.mubr.bf16.gmra.mrb[0].mxu0 %v156
    %v267 = vpop.f32.mrb[0].mxu0
    %v268 = vadd.f32 %v135, %v267
    %v269 = vpop.f32.mrb[0].mxu0
    %v270 = vpop.f32.mrb[0].mxu0
    %v271 = vadd.f32 %v135, %v270
    %v272 = vpop.f32.mrb[0].mxu0
    %273 = vdwg.mxu0
    %v274 = vmax.f32 %v244, 0.0
    %v275 = vmax.f32 %v247, 0.0
    %v276 = vmax.f32 %v252, 0.0
    %v277 = vmax.f32 %v255, 0.0
    %v278 = vmax.f32 %v260, 0.0
    %v279 = vmax.f32 %v263, 0.0
    %v280 = vmax.f32 %v268, 0.0
    %v281 = vmax.f32 %v271, 0.0
    %v282 = vsel %vm106, 1, 0
    %v283 = vsel %vm107, 1, 0
    %v284 = vsel %vm108, 1, 0
    %v285 = vsel %vm109, 1, 0
    %v286 = vsel %vm110, 1, 0
    %v287 = vsel %vm111, 1, 0
    %v288 = vsel %vm112, 1, 0
    %v289 = vsel %vm113, 1, 0
    %vm290 = vcmp.eq.s32.totalorder %v282, 1
    %vm291 = vcmp.eq.s32.totalorder %v283, 1
    %vm292 = vcmp.eq.s32.totalorder %v284, 1
    %vm293 = vcmp.eq.s32.totalorder %v285, 1
    %vm294 = vcmp.eq.s32.totalorder %v286, 1
    %vm295 = vcmp.eq.s32.totalorder %v287, 1
    %vm296 = vcmp.eq.s32.totalorder %v288, 1
    %vm297 = vcmp.eq.s32.totalorder %v289, 1
    %v298 = vsel %vm290, %v274, 0.0
    %v299 = vsel %vm291, %v275, 0.0
    %v300 = vsel %vm292, %v276, 0.0
    %v301 = vsel %vm293, %v277, 0.0
    %v302 = vsel %vm294, %v278, 0.0
    %v303 = vsel %vm295, %v279, 0.0
    %v304 = vsel %vm296, %v280, 0.0
    %v305 = vsel %vm297, %v281, 0.0
    %v306 = vadd.f32 %v298, %v299
    %v307 = vadd.f32 %v306, %v300
    %v308 = vadd.f32 %v307, %v301
    %v309 = vadd.f32 %v308, %v302
    %v310 = vadd.f32 %v309, %v303
    %v311 = vadd.f32 %v310, %v304
    %v312 = vadd.f32 %v311, %v305
    %v313 = vrot.slane %v312, 4
    %v314 = vadd.f32 %v312, %v313
    %v315 = vrot.slane %v314, 2
    %v316 = vadd.f32 %v314, %v315
    %v317 = vrot.slane %v316, 1
    %v318 = vadd.f32 %v316, %v317
    %v319 = vmul.f32 %v318, 0.02
    %v320 = vsub.f32 %v274, %v319
    %v321 = vsub.f32 %v275, %v319
    %v322 = vsub.f32 %v276, %v319
    %v323 = vsub.f32 %v277, %v319
    %v324 = vsub.f32 %v278, %v319
    %v325 = vsub.f32 %v279, %v319
    %v326 = vsub.f32 %v280, %v319
    %v327 = vsub.f32 %v281, %v319
    %v328 = vsel %vm290, %v320, 0.0
    %v329 = vsel %vm291, %v321, 0.0
    %v330 = vsel %vm292, %v322, 0.0
    %v331 = vsel %vm293, %v323, 0.0
    %v332 = vsel %vm294, %v324, 0.0
    %v333 = vsel %vm295, %v325, 0.0
    %v334 = vsel %vm296, %v326, 0.0
    %v335 = vsel %vm297, %v327, 0.0
    %v336 = vmul.f32 %v328, %v328
    %v337 = vmul.f32 %v329, %v329
    %v338 = vmul.f32 %v330, %v330
    %v339 = vmul.f32 %v331, %v331
    %v340 = vmul.f32 %v332, %v332
    %v341 = vmul.f32 %v333, %v333
    %v342 = vmul.f32 %v334, %v334
    %v343 = vmul.f32 %v335, %v335
    %v344 = vadd.f32 %v336, %v337
    %v345 = vadd.f32 %v344, %v338
    %v346 = vadd.f32 %v345, %v339
    %v347 = vadd.f32 %v346, %v340
    %v348 = vadd.f32 %v347, %v341
    %v349 = vadd.f32 %v348, %v342
    %v350 = vadd.f32 %v349, %v343
    %v351 = vrot.slane %v350, 4
    %v352 = vadd.f32 %v350, %v351
    %v353 = vrot.slane %v352, 2
    %v354 = vadd.f32 %v352, %v353
    %v355 = vrot.slane %v354, 1
    %v356 = vadd.f32 %v354, %v355
    %v357 = vmul.f32 %v356, 0.02
    %v358 = vld [vmem:[%s3] sm:$0x1]
    %v359 = vadd.f32 %v357, 1e-05
    %v360 = vrsqrt.pop %v359
    %v361 = vmul.f32 %v358, %v360
    %v362 = vld [vmem:[%s3 + $0x1] sm:$0x1]
    %v363 = vmul.f32 %v319, %v361
    %v364 = vsub.f32 %v362, %v363
    %v365 = vlaneseq
    %v366 = vshrl.u32 %v365, 7
    %v367 = vsub.s32 0, %v366
    %v368 = vrot.slane %v361, %v367
    %v369 = vmul.f32 %v274, %v368
    %v370 = vmul.f32 %v275, %v368
    %v371 = vmul.f32 %v276, %v368
    %v372 = vmul.f32 %v277, %v368
    %v373 = vmul.f32 %v278, %v368
    %v374 = vmul.f32 %v279, %v368
    %v375 = vmul.f32 %v280, %v368
    %v376 = vmul.f32 %v281, %v368
    %v377 = vlaneseq
    %v378 = vshrl.u32 %v377, 7
    %v379 = vsub.s32 0, %v378
    %v380 = vrot.slane %v364, %v379
    %v381 = vadd.f32 %v369, %v380
    %v382 = vadd.f32 %v370, %v380
    %v383 = vadd.f32 %v371, %v380
    %v384 = vadd.f32 %v372, %v380
    %v385 = vadd.f32 %v373, %v380
    %v386 = vadd.f32 %v374, %v380
    %v387 = vadd.f32 %v375, %v380
    %v388 = vadd.f32 %v376, %v380
    %v389 = vpack.c.bf16 %v382, %v381
    %v390 = vpack.c.bf16 %v384, %v383
    %v391 = vpack.c.bf16 %v386, %v385
    %v392 = vpack.c.bf16 %v388, %v387
    %v393 = vld [vmem:[#allocation7] sm:$0xf]
    %v394 = vld [vmem:[#allocation7 + $0x4] sm:$0xf]
    %v395 = vld [vmem:[#allocation7 + $0x8] sm:$0xf]
    %v396 = vld [vmem:[#allocation7 + $0xc] sm:$0xf]
    %v397 = vld [vmem:[#allocation7 + $0x10] sm:$0xf]
    %v398 = vld [vmem:[#allocation7 + $0x14] sm:$0xf]
    %v399 = vld [vmem:[#allocation7 + $0x18] sm:$0xf]
    %v400 = vld [vmem:[#allocation7 + $0x1c] sm:$0xf]
    %v401 = vld [vmem:[#allocation7 + $0x20] sm:$0xf]
    %v402 = vld [vmem:[#allocation7 + $0x24] sm:$0xf]
    %v403 = vld [vmem:[#allocation7 + $0x28] sm:$0xf]
    %v404 = vld [vmem:[#allocation7 + $0x2c] sm:$0xf]
    %v405 = vld [vmem:[#allocation7 + $0x30] sm:$0xf]
    %v406 = vld [vmem:[#allocation7 + $0x34] sm:$0xf]
    %v407 = vld [vmem:[#allocation7 + $0x38] sm:$0xf]
    %v408 = vld [vmem:[#allocation7 + $0x3c] sm:$0xf]
    %v409 = vld [vmem:[%s5] sm:$0x1]
    %v411 = vlaneseq
    %v412 = vshrl.u32 %v411, 7
    %v413 = vsub.s32 0, %v412
    %v414 = vrot.slane %v409, %v413
    %v432 = vunpack.c.l.b16 %v393
    %v433 = vunpack.c.l.b16 %v394
    %v434 = vunpack.c.l.b16 %v395
    %v435 = vunpack.c.l.b16 %v396
    %v436 = vunpack.c.l.b16 %v397
    %v437 = vunpack.c.l.b16 %v398
    %v438 = vunpack.c.l.b16 %v399
    %v439 = vunpack.c.l.b16 %v400
    %v440 = vunpack.c.l.b16 %v401
    %v441 = vunpack.c.l.b16 %v402
    %v442 = vunpack.c.l.b16 %v403
    %v443 = vunpack.c.l.b16 %v404
    %v444 = vunpack.c.l.b16 %v405
    %v445 = vunpack.c.l.b16 %v406
    %v446 = vunpack.c.l.b16 %v407
    %v447 = vunpack.c.l.b16 %v408
    %v448 = vpack.c.b16 %v433, %v432
    %v449 = vpack.c.b16 %v435, %v434
    %v450 = vpack.c.b16 %v437, %v436
    %v451 = vpack.c.b16 %v439, %v438
    %v452 = vpack.c.b16 %v441, %v440
    %v453 = vpack.c.b16 %v443, %v442
    %v454 = vpack.c.b16 %v445, %v444
    %v455 = vpack.c.b16 %v447, %v446
    %464 = vmatprep.subr.bf16.mxu0 0
    %465 = vmatpush1.bf16.msra.mxu0 %v448
    %466 = vmatprep.subr.bf16.mxu0 0
    %467 = vmatpush1.bf16.msra.mxu0 %v449
    %468 = vmatprep.subr.bf16.mxu0 0
    %469 = vmatpush1.bf16.msra.mxu0 %v450
    %470 = vmatprep.subr.bf16.mxu0 0
    %471 = vmatpush1.bf16.msra.mxu0 %v451
    %472 = vmatprep.subr.bf16.mxu0 0
    %473 = vmatpush1.bf16.msra.mxu0 %v452
    %474 = vmatprep.subr.bf16.mxu0 0
    %475 = vmatpush1.bf16.msra.mxu0 %v453
    %476 = vmatprep.subr.bf16.mxu0 0
    %477 = vmatpush1.bf16.msra.mxu0 %v454
    %478 = vmatprep.subr.bf16.mxu0 0
    %479 = vmatpush1.bf16.msra.mxu0 %v455
    %480 = vmatprep.subr.bf16.mxu0 0
    %481 = vmatpush1.bf16.msra.mxu0 0
    %482 = vmatprep.subr.bf16.mxu0 0
    %483 = vmatpush1.bf16.msra.mxu0 0
    %484 = vmatprep.subr.bf16.mxu0 0
    %485 = vmatpush1.bf16.msra.mxu0 0
    %486 = vmatprep.subr.bf16.mxu0 0
    %487 = vmatpush1.bf16.msra.mxu0 0
    %488 = vmatprep.subr.bf16.mxu0 0
    %489 = vmatpush1.bf16.msra.mxu0 0
    %490 = vmatprep.subr.bf16.mxu0 0
    %491 = vmatpush1.bf16.msra.mxu0 0
    %492 = vmatprep.subr.bf16.mxu0 0
    %493 = vmatpush1.bf16.msra.mxu0 0
    %494 = vmatprep.subr.bf16.mxu0 0
    %495 = vmatpush1.bf16.msra.mxu0 0
    %496 = vmatprep.mubr.bf16.mxu0 0
    %497 = vmatmul.mubr.bf16.gmra.mrb[0].mxu0 %v389
    %v498 = vpop.f32.mrb[0].mxu0
    %v499 = vadd.f32 %v414, %v498
    %v500 = vpop.f32.mrb[0].mxu0
    %v501 = vpop.f32.mrb[0].mxu0
    %v502 = vadd.f32 %v414, %v501
    %v503 = vpop.f32.mrb[0].mxu0
    %504 = vmatprep.mubr.bf16.mxu0 0
    %505 = vmatmul.mubr.bf16.gmra.mrb[0].mxu0 %v390
    %v506 = vpop.f32.mrb[0].mxu0
    %v507 = vadd.f32 %v414, %v506
    %v508 = vpop.f32.mrb[0].mxu0
    %v509 = vpop.f32.mrb[0].mxu0
    %v510 = vadd.f32 %v414, %v509
    %v511 = vpop.f32.mrb[0].mxu0
    %512 = vmatprep.mubr.bf16.mxu0 0
    %513 = vmatmul.mubr.bf16.gmra.mrb[0].mxu0 %v391
    %v514 = vpop.f32.mrb[0].mxu0
    %v515 = vadd.f32 %v414, %v514
    %v516 = vpop.f32.mrb[0].mxu0
    %v517 = vpop.f32.mrb[0].mxu0
    %v518 = vadd.f32 %v414, %v517
    %v519 = vpop.f32.mrb[0].mxu0
    %520 = vmatprep.mubr.bf16.mxu0 0
    %521 = vmatmul.mubr.bf16.gmra.mrb[0].mxu0 %v392
    %v522 = vpop.f32.mrb[0].mxu0
    %v523 = vadd.f32 %v414, %v522
    %v524 = vpop.f32.mrb[0].mxu0
    %v525 = vpop.f32.mrb[0].mxu0
    %v526 = vadd.f32 %v414, %v525
    %v527 = vpop.f32.mrb[0].mxu0
    %528 = vdwg.mxu0
    %v529 = vmax.f32 %v499, 0.0
    %v530 = vmax.f32 %v502, 0.0
    %v531 = vmax.f32 %v507, 0.0
    %v532 = vmax.f32 %v510, 0.0
    %v533 = vmax.f32 %v515, 0.0
    %v534 = vmax.f32 %v518, 0.0
    %v535 = vmax.f32 %v523, 0.0
    %v536 = vmax.f32 %v526, 0.0
    %v537 = vsel %vm290, %v529, 0.0
    %v538 = vsel %vm291, %v530, 0.0
    %v539 = vsel %vm292, %v531, 0.0
    %v540 = vsel %vm293, %v532, 0.0
    %v541 = vsel %vm294, %v533, 0.0
    %v542 = vsel %vm295, %v534, 0.0
    %v543 = vsel %vm296, %v535, 0.0
    %v544 = vsel %vm297, %v536, 0.0
    %v545 = vadd.f32 %v537, %v538
    %v546 = vadd.f32 %v545, %v539
    %v547 = vadd.f32 %v546, %v540
    %v548 = vadd.f32 %v547, %v541
    %v549 = vadd.f32 %v548, %v542
    %v550 = vadd.f32 %v549, %v543
    %v551 = vadd.f32 %v550, %v544
    %v552 = vrot.slane %v551, 4
    %v553 = vadd.f32 %v551, %v552
    %v554 = vrot.slane %v553, 2
    %v555 = vadd.f32 %v553, %v554
    %v556 = vrot.slane %v555, 1
    %v557 = vadd.f32 %v555, %v556
    %v558 = vmul.f32 %v557, 0.02
    %v559 = vsub.f32 %v529, %v558
    %v560 = vsub.f32 %v530, %v558
    %v561 = vsub.f32 %v531, %v558
    %v562 = vsub.f32 %v532, %v558
    %v563 = vsub.f32 %v533, %v558
    %v564 = vsub.f32 %v534, %v558
    %v565 = vsub.f32 %v535, %v558
    %v566 = vsub.f32 %v536, %v558
    %v567 = vsel %vm290, %v559, 0.0
    %v568 = vsel %vm291, %v560, 0.0
    %v569 = vsel %vm292, %v561, 0.0
    %v570 = vsel %vm293, %v562, 0.0
    %v571 = vsel %vm294, %v563, 0.0
    %v572 = vsel %vm295, %v564, 0.0
    %v573 = vsel %vm296, %v565, 0.0
    %v574 = vsel %vm297, %v566, 0.0
    %v575 = vmul.f32 %v567, %v567
    %v576 = vmul.f32 %v568, %v568
    %v577 = vmul.f32 %v569, %v569
    %v578 = vmul.f32 %v570, %v570
    %v579 = vmul.f32 %v571, %v571
    %v580 = vmul.f32 %v572, %v572
    %v581 = vmul.f32 %v573, %v573
    %v582 = vmul.f32 %v574, %v574
    %v583 = vadd.f32 %v575, %v576
    %v584 = vadd.f32 %v583, %v577
    %v585 = vadd.f32 %v584, %v578
    %v586 = vadd.f32 %v585, %v579
    %v587 = vadd.f32 %v586, %v580
    %v588 = vadd.f32 %v587, %v581
    %v589 = vadd.f32 %v588, %v582
    %v590 = vrot.slane %v589, 4
    %v591 = vadd.f32 %v589, %v590
    %v592 = vrot.slane %v591, 2
    %v593 = vadd.f32 %v591, %v592
    %v594 = vrot.slane %v593, 1
    %v595 = vadd.f32 %v593, %v594
    %v596 = vmul.f32 %v595, 0.02
    %v597 = vld [vmem:[%s6] sm:$0x1]
    %v598 = vadd.f32 %v596, 1e-05
    %v599 = vrsqrt.pop %v598
    %v600 = vmul.f32 %v597, %v599
    %v601 = vld [vmem:[%s6 + $0x1] sm:$0x1]
    %v602 = vmul.f32 %v558, %v600
    %v603 = vsub.f32 %v601, %v602
    %v604 = vlaneseq
    %v605 = vshrl.u32 %v604, 7
    %v606 = vsub.s32 0, %v605
    %v607 = vrot.slane %v600, %v606
    %v608 = vmul.f32 %v529, %v607
    %v609 = vmul.f32 %v530, %v607
    %v610 = vmul.f32 %v531, %v607
    %v611 = vmul.f32 %v532, %v607
    %v612 = vmul.f32 %v533, %v607
    %v613 = vmul.f32 %v534, %v607
    %v614 = vmul.f32 %v535, %v607
    %v615 = vmul.f32 %v536, %v607
    %v616 = vlaneseq
    %v617 = vshrl.u32 %v616, 7
    %v618 = vsub.s32 0, %v617
    %v619 = vrot.slane %v603, %v618
    %v620 = vadd.f32 %v608, %v619
    %v621 = vadd.f32 %v609, %v619
    %v622 = vadd.f32 %v610, %v619
    %v623 = vadd.f32 %v611, %v619
    %v624 = vadd.f32 %v612, %v619
    %v625 = vadd.f32 %v613, %v619
    %v626 = vadd.f32 %v614, %v619
    %v627 = vadd.f32 %v615, %v619
    %v628 = vpack.c.bf16 %v621, %v620
    %v629 = vpack.c.bf16 %v623, %v622
    %v630 = vpack.c.bf16 %v625, %v624
    %v631 = vpack.c.bf16 %v627, %v626
    %v632 = vld [vmem:[#allocation8] sm:$0xf]
    %v633 = vld [vmem:[#allocation8 + $0x4] sm:$0xf]
    %v634 = vld [vmem:[#allocation8 + $0x8] sm:$0xf]
    %v635 = vld [vmem:[#allocation8 + $0xc] sm:$0xf]
    %v636 = vld [vmem:[#allocation8 + $0x10] sm:$0xf]
    %v637 = vld [vmem:[#allocation8 + $0x14] sm:$0xf]
    %v638 = vld [vmem:[#allocation8 + $0x18] sm:$0xf]
    %v639 = vld [vmem:[#allocation8 + $0x1c] sm:$0xf]
    %v640 = vld [vmem:[#allocation8 + $0x20] sm:$0xf]
    %v641 = vld [vmem:[#allocation8 + $0x24] sm:$0xf]
    %v642 = vld [vmem:[#allocation8 + $0x28] sm:$0xf]
    %v643 = vld [vmem:[#allocation8 + $0x2c] sm:$0xf]
    %v644 = vld [vmem:[#allocation8 + $0x30] sm:$0xf]
    %v645 = vld [vmem:[#allocation8 + $0x34] sm:$0xf]
    %v646 = vld [vmem:[#allocation8 + $0x38] sm:$0xf]
    %v647 = vld [vmem:[#allocation8 + $0x3c] sm:$0xf]
    %v648 = vld [vmem:[%s8] sm:$0x1]
    %v650 = vlaneseq
    %v651 = vshrl.u32 %v650, 7
    %v652 = vsub.s32 0, %v651
    %v653 = vrot.slane %v648, %v652
    %v671 = vunpack.c.l.b16 %v632
    %v672 = vunpack.c.l.b16 %v633
    %v673 = vunpack.c.l.b16 %v634
    %v674 = vunpack.c.l.b16 %v635
    %v675 = vunpack.c.l.b16 %v636
    %v676 = vunpack.c.l.b16 %v637
    %v677 = vunpack.c.l.b16 %v638
    %v678 = vunpack.c.l.b16 %v639
    %v679 = vunpack.c.l.b16 %v640
    %v680 = vunpack.c.l.b16 %v641
    %v681 = vunpack.c.l.b16 %v642
    %v682 = vunpack.c.l.b16 %v643
    %v683 = vunpack.c.l.b16 %v644
    %v684 = vunpack.c.l.b16 %v645
    %v685 = vunpack.c.l.b16 %v646
    %v686 = vunpack.c.l.b16 %v647
    %v687 = vpack.c.b16 %v672, %v671
    %v688 = vpack.c.b16 %v674, %v673
    %v689 = vpack.c.b16 %v676, %v675
    %v690 = vpack.c.b16 %v678, %v677
    %v691 = vpack.c.b16 %v680, %v679
    %v692 = vpack.c.b16 %v682, %v681
    %v693 = vpack.c.b16 %v684, %v683
    %v694 = vpack.c.b16 %v686, %v685
    %703 = vmatprep.subr.bf16.mxu0 0
    %704 = vmatpush1.bf16.msra.mxu0 %v687
    %705 = vmatprep.subr.bf16.mxu0 0
    %706 = vmatpush1.bf16.msra.mxu0 %v688
    %707 = vmatprep.subr.bf16.mxu0 0
    %708 = vmatpush1.bf16.msra.mxu0 %v689
    %709 = vmatprep.subr.bf16.mxu0 0
    %710 = vmatpush1.bf16.msra.mxu0 %v690
    %711 = vmatprep.subr.bf16.mxu0 0
    %712 = vmatpush1.bf16.msra.mxu0 %v691
    %713 = vmatprep.subr.bf16.mxu0 0
    %714 = vmatpush1.bf16.msra.mxu0 %v692
    %715 = vmatprep.subr.bf16.mxu0 0
    %716 = vmatpush1.bf16.msra.mxu0 %v693
    %717 = vmatprep.subr.bf16.mxu0 0
    %718 = vmatpush1.bf16.msra.mxu0 %v694
    %719 = vmatprep.subr.bf16.mxu0 0
    %720 = vmatpush1.bf16.msra.mxu0 0
    %721 = vmatprep.subr.bf16.mxu0 0
    %722 = vmatpush1.bf16.msra.mxu0 0
    %723 = vmatprep.subr.bf16.mxu0 0
    %724 = vmatpush1.bf16.msra.mxu0 0
    %725 = vmatprep.subr.bf16.mxu0 0
    %726 = vmatpush1.bf16.msra.mxu0 0
    %727 = vmatprep.subr.bf16.mxu0 0
    %728 = vmatpush1.bf16.msra.mxu0 0
    %729 = vmatprep.subr.bf16.mxu0 0
    %730 = vmatpush1.bf16.msra.mxu0 0
    %731 = vmatprep.subr.bf16.mxu0 0
    %732 = vmatpush1.bf16.msra.mxu0 0
    %733 = vmatprep.subr.bf16.mxu0 0
    %734 = vmatpush1.bf16.msra.mxu0 0
    %735 = vmatprep.mubr.bf16.mxu0 0
    %736 = vmatmul.mubr.bf16.gmra.mrb[0].mxu0 %v628
    %v737 = vpop.f32.mrb[0].mxu0
    %v738 = vadd.f32 %v653, %v737
    %v739 = vpop.f32.mrb[0].mxu0
    %v740 = vpop.f32.mrb[0].mxu0
    %v741 = vadd.f32 %v653, %v740
    %v742 = vpop.f32.mrb[0].mxu0
    %743 = vmatprep.mubr.bf16.mxu0 0
    %744 = vmatmul.mubr.bf16.gmra.mrb[0].mxu0 %v629
    %v745 = vpop.f32.mrb[0].mxu0
    %v746 = vadd.f32 %v653, %v745
    %v747 = vpop.f32.mrb[0].mxu0
    %v748 = vpop.f32.mrb[0].mxu0
    %v749 = vadd.f32 %v653, %v748
    %v750 = vpop.f32.mrb[0].mxu0
    %751 = vmatprep.mubr.bf16.mxu0 0
    %752 = vmatmul.mubr.bf16.gmra.mrb[0].mxu0 %v630
    %v753 = vpop.f32.mrb[0].mxu0
    %v754 = vadd.f32 %v653, %v753
    %v755 = vpop.f32.mrb[0].mxu0
    %v756 = vpop.f32.mrb[0].mxu0
    %v757 = vadd.f32 %v653, %v756
    %v758 = vpop.f32.mrb[0].mxu0
    %759 = vmatprep.mubr.bf16.mxu0 0
    %760 = vmatmul.mubr.bf16.gmra.mrb[0].mxu0 %v631
    %v761 = vpop.f32.mrb[0].mxu0
    %v762 = vadd.f32 %v653, %v761
    %v763 = vpop.f32.mrb[0].mxu0
    %v764 = vpop.f32.mrb[0].mxu0
    %v765 = vadd.f32 %v653, %v764
    %v766 = vpop.f32.mrb[0].mxu0
    %767 = vdwg.mxu0
    %768 = vst [vmem:[#allocation10] sm:$0xff] %v738
    %769 = vst [vmem:[#allocation10 + $0x8] sm:$0xff] %v741
    %770 = vst [vmem:[#allocation10 + $0x10] sm:$0xff] %v746
    %771 = vst [vmem:[#allocation10 + $0x18] sm:$0xff] %v749
    %772 = vst [vmem:[#allocation10 + $0x20] sm:$0xff] %v754
    %773 = vst [vmem:[#allocation10 + $0x28] sm:$0xff] %v757
    %774 = vst [vmem:[#allocation10 + $0x30] sm:$0xff] %v762
    %775 = vst [vmem:[#allocation10 + $0x38] sm:$0xff] %v765
    // Predicated region
    $region54: #{tpu_custom_call.1} parent=1 // pred_check
      _
    $region55: #{tpu_custom_call.1} parent=1 // pred_check_branch
      %777 = sbr.rel (0) target = $region57
    $region56: #{tpu_custom_call.1} parent=1 // pred_region
      %s779 = ssub.s32 1024, 1024
      %780 = vsyncadd [#allocation4], %s779
      %s781 = sshll.u32 [#allocation10], 4
      %s782 = int_to_ptr.vmem [resolvable:$true] %s781
      %787 = dma.vmem_to_hbm [thread:$0]  %s782, 1024, %s9, [#allocation4], 128, 128, 8
    $region57: #{tpu_custom_call.1} parent=1 // pred_fallthru
      _
    // Predicated region
    $region58: #{tpu_custom_call.1} parent=1 // pred_check
      _
    $region59: #{tpu_custom_call.1} parent=1 // pred_check_branch
      %789 = sbr.rel (0) target = $region61
    $region60: #{tpu_custom_call.1} parent=1 // pred_region
      %790 = dma.done [#allocation4], 1024
    $region61: #{tpu_custom_call.1} parent=1 // pred_fallthru
      _
    %791 = vsyncpa [#allocation3], 1
    %792 = vsyncpa [#allocation6], 1
    %793 = vsyncpa [#allocation9], 1
    %794 = vsyncpa [#allocation4], 1

</llo_original>
